<compile_context>
chip_gen: v7x
topology: tpu7x:2x2x1
jax: 0.10.0
libtpu: 0.0.40
codegen_flags: <defaults>
</compile_context>

<pallas_src>
import jax
import jax.numpy as jnp
from jax.experimental import pallas as pl
from jax.experimental.pallas import tpu as pltpu


# ----------------------------------------------------------------------------
# Kernel factory: per-point channel MLP (4 MXU matmuls) + streaming max.
# ----------------------------------------------------------------------------
def _make_kernel(chunk, n_chunks, compute_dtype):
    def kernel(x_ref, w0_ref, b0_ref, w1_ref, b1_ref, w2_ref, b2_ref,
               w3_ref, b3_ref, o_ref, max_sc):
        """One (batch, point-shard, point-tile) grid step.

        x_ref  : [C, tn]        input points slab (original dtype), tn on lanes
        wK_ref : [CoutK, CinK]  layer weights (bf16), PyTorch orientation
        bK_ref : [CoutK, 1]     layer biases (f32), lane-broadcast
        o_ref  : [Cout, 1]      per-(b, shard) max feature, written once
        max_sc : [Cout, chunk]  f32 running-max scratch, resident across k
        """
        k = pl.program_id(2)

        @pl.when(k == 0)
        def _init():
            max_sc[...] = jnp.full(max_sc.shape, -jnp.inf, max_sc.dtype)

        def mlp_chunk(xc):
            # NOTE: layer 0 has a tiny contraction depth (Cin=3); MXU has slack
            # in this mem-bound regime so it stays a jnp.dot (a v5e VPU-FMA
            # rewrite only pays off if the MXU slot is actually binding).
            h = jnp.dot(w0_ref[...], xc,
                        preferred_element_type=jnp.float32) + b0_ref[...]
            h = jnp.maximum(h, 0.0).astype(compute_dtype)
            h = jnp.dot(w1_ref[...], h,
                        preferred_element_type=jnp.float32) + b1_ref[...]
            h = jnp.maximum(h, 0.0).astype(compute_dtype)
            h = jnp.dot(w2_ref[...], h,
                        preferred_element_type=jnp.float32) + b2_ref[...]
            h = jnp.maximum(h, 0.0).astype(compute_dtype)
            h = jnp.dot(w3_ref[...], h,
                        preferred_element_type=jnp.float32) + b3_ref[...]
            return jnp.maximum(h, 0.0)          # [Cout, chunk] f32

        # Static sub-chunk loop over the point (lane) axis: each chunk's
        # intermediates die into max_sc, keeping live vregs bounded even for
        # wide Cout.  Slices are static -> zero-cost ref views.
        for c in range(n_chunks):
            xc = x_ref[:, pl.ds(c * chunk, chunk)].astype(compute_dtype)
            max_sc[...] = jnp.maximum(max_sc[...], mlp_chunk(xc))   # pure VPU

        @pl.when(k == pl.num_programs(2) - 1)
        def _flush():
            # One cross-lane (XLU) reduce + one small masked store per shard.
            o_ref[...] = jnp.max(max_sc[...], axis=-1, keepdims=True)

    return kernel


# ----------------------------------------------------------------------------
# Tile / chunk selection
# ----------------------------------------------------------------------------
def _pick_point_tile(n_shard, n_total, cout_max, target=None):
    """Point tile (lane axis): biggest 128-multiple divisor of n_shard up to
    target; falls back to the full point axis (block == full dim escape)."""
    if target is None:
        target = 1024 if cout_max <= 256 else 512
    target = min(target, n_shard)
    t0 = (target // 128) * 128
    for tn in range(t0, 127, -128):
        if n_shard % tn == 0:
            return tn
    if n_shard == n_total:
        return n_shard
    raise ValueError(
        f"cannot tile {n_shard} points/shard into 128-aligned lane tiles")


def _pick_chunk(tn, cout_max, budget_bytes=512 * 1024):
    """Lane sub-chunk so the widest live f32 intermediate [cout_max, chunk]
    stays ~<= 128 vregs (avoids spill-store saturation on v5e/v6e)."""
    if tn <= 128 or tn % 128 != 0:
        return tn
    max_chunk = max(128, (budget_bytes // (4 * cout_max)) // 128 * 128)
    chunk = min(tn, max_chunk)
    while tn % chunk:
        chunk -= 128
    return chunk


# ----------------------------------------------------------------------------
# Wrapper
# ----------------------------------------------------------------------------
def pointnet_forward(points, params, *, tn=None, num_point_shards=1,
                     compute_dtype=jnp.bfloat16):
    """points: [B, C, N] (PyTorch layout, kept as-is) -> [B, mlp[-1]]."""
    B, C, N = points.shape
    weights = [w.astype(compute_dtype) for w in params["weights"]]      # [Cout, Cin]
    biases = [b.astype(jnp.float32).reshape(-1, 1) for b in params["biases"]]
    assert len(weights) == 4 and len(biases) == 4
    couts = [int(w.shape[0]) for w in weights]
    cout_last, cout_max = couts[-1], max(couts)

    P = int(num_point_shards)         # >1: fill both v7x TCs when B is small
    assert P >= 1 and N % P == 0, "num_point_shards must divide N"
    n_shard = N // P
    if tn is None:
        tn = _pick_point_tile(n_shard, N, cout_max)
    assert n_shard % tn == 0, f"point tile {tn} must divide {n_shard}"
    assert tn % 128 == 0 or tn == N, (
        "point tile must be a multiple of 128 (lane axis) or span the full axis")
    K = n_shard // tn                 # reduction steps per (batch, shard)
    chunk = _pick_chunk(tn, cout_max)
    n_chunks = tn // chunk

    # NOTE: no ragged-N handling; padded points would need masking before max.
    in_specs = [pl.BlockSpec((None, C, tn),
                             lambda b, p, k, K=K: (b, 0, p * K + k))]
    operands = [points]
    for w, bias in zip(weights, biases):
        # Constant index_map -> Pallas skips re-DMA across the grid.
        # TODO(synk): single-buffer (pl.Buffered(1)) / VMEM-stage the weights
        #             to reclaim v7x VMEM headroom when tn is pushed up.
        in_specs.append(pl.BlockSpec(w.shape, lambda b, p, k: (0, 0)))
        in_specs.append(pl.BlockSpec(bias.shape, lambda b, p, k: (0, 0)))
        operands += [w, bias]

    flops = 2 * B * N * sum(int(w.shape[0]) * int(w.shape[1]) for w in weights)
    bytes_accessed = int(
        points.size * points.dtype.itemsize
        + sum(int(w.size) * w.dtype.itemsize for w in weights)
        + sum(int(b.size) * 4 for b in biases)
        + B * P * cout_last * 4)

    # VMEM estimate: double-buffered operands + scratch + live intermediates.
    weight_bytes = (sum(int(w.size) * w.dtype.itemsize for w in weights)
                    + sum(int(b.size) * 4 for b in biases))
    vmem_est = (2 * (C * tn * points.dtype.itemsize + weight_bytes + cout_last * 4)
                + cout_last * chunk * 4
                + 6 * cout_max * chunk * 4)
    cp_kwargs = dict(dimension_semantics=("parallel", "parallel", "arbitrary"))
    if vmem_est > 24 * (1 << 20):
        # v7x scoped default is 32 MiB (64 MiB physical): be explicit when big.
        cp_kwargs["vmem_limit_bytes"] = int(min(1.5 * vmem_est, 60 * (1 << 20)))

    out = pl.pallas_call(
        _make_kernel(chunk, n_chunks, compute_dtype),
        out_shape=jax.ShapeDtypeStruct((B, P, cout_last, 1), jnp.float32),
        grid=(B, P, K),
        in_specs=in_specs,
        out_specs=pl.BlockSpec((None, None, cout_last, 1),
                               lambda b, p, k: (b, p, 0, 0)),
        scratch_shapes=[pltpu.VMEM((cout_last, chunk), jnp.float32)],
        compiler_params=pltpu.CompilerParams(**cp_kwargs),
        cost_estimate=pl.CostEstimate(flops=int(flops), transcendentals=0,
                                      bytes_accessed=bytes_accessed),
    )(*operands)

    # Fold per-shard partial maxes (tiny [B, P, Cout] tensor) -> [B, Cout].
    return jnp.max(out[..., 0], axis=1)


# ----------------------------------------------------------------------------
# Deterministic parameter init (Conv2d 1x1: weight [Cout, Cin], bias [Cout])
# ----------------------------------------------------------------------------
def init_params(key, in_channel, mlp):
    chans = [in_channel] + list(mlp)
    weights, biases = [], []
    for li in range(4):
        cin, cout = chans[li], chans[li + 1]
        key, kw, kb = jax.random.split(key, 3)
        bound = 1.0 / (cin ** 0.5)
        weights.append(jax.random.uniform(kw, (cout, cin), jnp.float32,
                                          -bound, bound))
        biases.append(jax.random.uniform(kb, (cout,), jnp.float32,
                                         -bound, bound))
    return {"weights": weights, "biases": biases}


# ----------------------------------------------------------------------------
# Pure-JAX f32 reference (same math as PyTorch forward, norm=False, res=False)
# ----------------------------------------------------------------------------
def pointnet_reference(points, params):
    h = points.astype(jnp.float32)                              # [B, C, N]
    for w, b in zip(params["weights"], params["biases"]):
        h = jnp.maximum(
            jnp.einsum("oc,bcn->bon", w.astype(jnp.float32), h)
            + b.astype(jnp.float32)[None, :, None], 0.0)
    return jnp.max(h, axis=-1)                                  # [B, Cout]


if __name__ == "__main__":
    key = jax.random.PRNGKey(0)
    B, in_channel, N = 2, 3, 512
    mlp = [8, 16, 16, 32]

    k_pts, k_par = jax.random.split(key)
    points = jax.random.normal(k_pts, (B, in_channel, N), jnp.float32)
    params = init_params(k_par, in_channel, mlp)

    # tn=128, 2 point shards -> grid (2, 2, 2): exercises the point-parallel
    # split, the multi-tile streaming max, and the init/flush gates.
    feats = pointnet_forward(points, params, tn=128, num_point_shards=2)
    jax.block_until_ready(feats)
    assert feats.shape == (B, mlp[-1])

    ref = pointnet_reference(points, params)
    # bf16 activations/weights vs f32 reference -> modest tolerance.
    assert jnp.allclose(feats, ref, atol=5e-2, rtol=5e-2), "mismatch vs reference"

    print("KERNEL_OK")
</pallas_src>

<mosaic_0001>
module attributes {stable_mosaic.version = 11 : i64} {
  func.func @kernel(%arg0: i32, %arg1: i32, %arg2: i32, %arg3: memref<1x3x128xf32, #tpu.memory_space<vmem>>, %arg4: memref<8x3xbf16, #tpu.memory_space<vmem>>, %arg5: memref<8x1xf32, #tpu.memory_space<vmem>>, %arg6: memref<16x8xbf16, #tpu.memory_space<vmem>>, %arg7: memref<16x1xf32, #tpu.memory_space<vmem>>, %arg8: memref<16x16xbf16, #tpu.memory_space<vmem>>, %arg9: memref<16x1xf32, #tpu.memory_space<vmem>>, %arg10: memref<32x16xbf16, #tpu.memory_space<vmem>>, %arg11: memref<32x1xf32, #tpu.memory_space<vmem>>, %arg12: memref<1x1x32x1xf32, #tpu.memory_space<vmem>>, %arg13: memref<32x128xf32, #tpu.memory_space<vmem>>) attributes {dimension_semantics = [#tpu.dimension_semantics<parallel>, #tpu.dimension_semantics<parallel>, #tpu.dimension_semantics<arbitrary>], iteration_bounds = array<i64: 2, 2, 2>, scalar_prefetch = 0 : i64, scratch_operands = 1 : i64, tpu.core_type = #tpu.core_type<tc>, window_params = [{transform_indices = @transform_0, window_bounds = array<i64: 1, 3, 128>}, {pipeline_mode = #tpu.pipeline_mode<synchronous>, transform_indices = @transform_1, window_bounds = array<i64: 8, 3>}, {pipeline_mode = #tpu.pipeline_mode<synchronous>, transform_indices = @transform_2, window_bounds = array<i64: 8, 1>}, {pipeline_mode = #tpu.pipeline_mode<synchronous>, transform_indices = @transform_3, window_bounds = array<i64: 16, 8>}, {pipeline_mode = #tpu.pipeline_mode<synchronous>, transform_indices = @transform_4, window_bounds = array<i64: 16, 1>}, {pipeline_mode = #tpu.pipeline_mode<synchronous>, transform_indices = @transform_5, window_bounds = array<i64: 16, 16>}, {pipeline_mode = #tpu.pipeline_mode<synchronous>, transform_indices = @transform_6, window_bounds = array<i64: 16, 1>}, {pipeline_mode = #tpu.pipeline_mode<synchronous>, transform_indices = @transform_7, window_bounds = array<i64: 32, 16>}, {pipeline_mode = #tpu.pipeline_mode<synchronous>, transform_indices = @transform_8, window_bounds = array<i64: 32, 1>}, {transform_indices = @transform_9, window_bounds = array<i64: 1, 1, 32, 1>}]} {
    %c0_i32 = arith.constant 0 : i32
    %0 = arith.cmpi eq, %arg2, %c0_i32 : i32
    %1 = arith.extui %0 : i1 to i32
    %c0_i32_0 = arith.constant 0 : i32
    %2 = arith.cmpi ne, %1, %c0_i32_0 : i32
    scf.if %2 {
      %cst_31 = arith.constant 0xFF800000 : f32
      %43 = vector.broadcast %cst_31 : f32 to vector<32x128xf32>
      %c0_32 = arith.constant 0 : index
      %c0_33 = arith.constant 0 : index
      %44 = vector.load %arg13[%c0_32, %c0_33] : memref<32x128xf32, #tpu.memory_space<vmem>>, vector<32x128xf32>
      tpu.vector_store %arg13[%c0_32, %c0_33], %43 {strides = array<i32>} : memref<32x128xf32, #tpu.memory_space<vmem>>, vector<32x128xf32>,
    } else {
    }
    %c0 = arith.constant 0 : index
    %c0_1 = arith.constant 0 : index
    %c0_2 = arith.constant 0 : index
    %3 = vector.load %arg3[%c0, %c0_1, %c0_2] : memref<1x3x128xf32, #tpu.memory_space<vmem>>, vector<1x3x128xf32>
    %4 = vector.shape_cast %3 : vector<1x3x128xf32> to vector<3x128xf32>
    %5 = arith.truncf %4 : vector<3x128xf32> to vector<3x128xbf16>
    %c0_3 = arith.constant 0 : index
    %c0_4 = arith.constant 0 : index
    %6 = vector.load %arg13[%c0_3, %c0_4] : memref<32x128xf32, #tpu.memory_space<vmem>>, vector<32x128xf32>
    %c0_5 = arith.constant 0 : index
    %c0_6 = arith.constant 0 : index
    %7 = vector.load %arg4[%c0_5, %c0_6] : memref<8x3xbf16, #tpu.memory_space<vmem>>, vector<8x3xbf16>
    %cst = arith.constant dense<0.000000e+00> : vector<8x128xf32>
    %8 = tpu.matmul %7, %5, %cst {dimension_numbers = #tpu.dot_dimension_numbers<[1], [0], [0], [1], [0, 0, 1, 1], [], []>} : vector<8x3xbf16>, vector<3x128xbf16>, vector<8x128xf32> -> vector<8x128xf32>
    %c0_7 = arith.constant 0 : index
    %c0_8 = arith.constant 0 : index
    %9 = vector.load %arg5[%c0_7, %c0_8] : memref<8x1xf32, #tpu.memory_space<vmem>>, vector<8x1xf32>
    %10 = vector.broadcast %9 : vector<8x1xf32> to vector<8x128xf32>
    %11 = arith.addf %8, %10 : vector<8x128xf32>
    %cst_9 = arith.constant 0.000000e+00 : f32
    %12 = vector.broadcast %cst_9 : f32 to vector<8x128xf32>
    %13 = arith.maximumf %11, %12 : vector<8x128xf32>
    %14 = arith.truncf %13 : vector<8x128xf32> to vector<8x128xbf16>
    %c0_10 = arith.constant 0 : index
    %c0_11 = arith.constant 0 : index
    %15 = vector.load %arg6[%c0_10, %c0_11] : memref<16x8xbf16, #tpu.memory_space<vmem>>, vector<16x8xbf16>
    %cst_12 = arith.constant dense<0.000000e+00> : vector<16x128xf32>
    %16 = tpu.matmul %15, %14, %cst_12 {dimension_numbers = #tpu.dot_dimension_numbers<[1], [0], [0], [1], [0, 0, 1, 1], [], []>} : vector<16x8xbf16>, vector<8x128xbf16>, vector<16x128xf32> -> vector<16x128xf32>
    %c0_13 = arith.constant 0 : index
    %c0_14 = arith.constant 0 : index
    %17 = vector.load %arg7[%c0_13, %c0_14] : memref<16x1xf32, #tpu.memory_space<vmem>>, vector<16x1xf32>
    %18 = vector.broadcast %17 : vector<16x1xf32> to vector<16x128xf32>
    %19 = arith.addf %16, %18 : vector<16x128xf32>
    %cst_15 = arith.constant 0.000000e+00 : f32
    %20 = vector.broadcast %cst_15 : f32 to vector<16x128xf32>
    %21 = arith.maximumf %19, %20 : vector<16x128xf32>
    %22 = arith.truncf %21 : vector<16x128xf32> to vector<16x128xbf16>
    %c0_16 = arith.constant 0 : index
    %c0_17 = arith.constant 0 : index
    %23 = vector.load %arg8[%c0_16, %c0_17] : memref<16x16xbf16, #tpu.memory_space<vmem>>, vector<16x16xbf16>
    %cst_18 = arith.constant dense<0.000000e+00> : vector<16x128xf32>
    %24 = tpu.matmul %23, %22, %cst_18 {dimension_numbers = #tpu.dot_dimension_numbers<[1], [0], [0], [1], [0, 0, 1, 1], [], []>} : vector<16x16xbf16>, vector<16x128xbf16>, vector<16x128xf32> -> vector<16x128xf32>
    %c0_19 = arith.constant 0 : index
    %c0_20 = arith.constant 0 : index
    %25 = vector.load %arg9[%c0_19, %c0_20] : memref<16x1xf32, #tpu.memory_space<vmem>>, vector<16x1xf32>
    %26 = vector.broadcast %25 : vector<16x1xf32> to vector<16x128xf32>
    %27 = arith.addf %24, %26 : vector<16x128xf32>
    %cst_21 = arith.constant 0.000000e+00 : f32
    %28 = vector.broadcast %cst_21 : f32 to vector<16x128xf32>
    %29 = arith.maximumf %27, %28 : vector<16x128xf32>
    %30 = arith.truncf %29 : vector<16x128xf32> to vector<16x128xbf16>
    %c0_22 = arith.constant 0 : index
    %c0_23 = arith.constant 0 : index
    %31 = vector.load %arg10[%c0_22, %c0_23] : memref<32x16xbf16, #tpu.memory_space<vmem>>, vector<32x16xbf16>
    %cst_24 = arith.constant dense<0.000000e+00> : vector<32x128xf32>
    %32 = tpu.matmul %31, %30, %cst_24 {dimension_numbers = #tpu.dot_dimension_numbers<[1], [0], [0], [1], [0, 0, 1, 1], [], []>} : vector<32x16xbf16>, vector<16x128xbf16>, vector<32x128xf32> -> vector<32x128xf32>
    %c0_25 = arith.constant 0 : index
    %c0_26 = arith.constant 0 : index
    %33 = vector.load %arg11[%c0_25, %c0_26] : memref<32x1xf32, #tpu.memory_space<vmem>>, vector<32x1xf32>
    %34 = vector.broadcast %33 : vector<32x1xf32> to vector<32x128xf32>
    %35 = arith.addf %32, %34 : vector<32x128xf32>
    %cst_27 = arith.constant 0.000000e+00 : f32
    %36 = vector.broadcast %cst_27 : f32 to vector<32x128xf32>
    %37 = arith.maximumf %35, %36 : vector<32x128xf32>
    %38 = arith.maximumf %6, %37 : vector<32x128xf32>
    %c0_28 = arith.constant 0 : index
    %c0_29 = arith.constant 0 : index
    %39 = vector.load %arg13[%c0_28, %c0_29] : memref<32x128xf32, #tpu.memory_space<vmem>>, vector<32x128xf32>
    tpu.vector_store %arg13[%c0_28, %c0_29], %38 {strides = array<i32>} : memref<32x128xf32, #tpu.memory_space<vmem>>, vector<32x128xf32>,
    %c1_i32 = arith.constant 1 : i32
    %40 = arith.cmpi eq, %arg2, %c1_i32 : i32
    %41 = arith.extui %40 : i1 to i32
    %c0_i32_30 = arith.constant 0 : i32
    %42 = arith.cmpi ne, %41, %c0_i32_30 : i32
    scf.if %42 {
      %c0_31 = arith.constant 0 : index
      %c0_32 = arith.constant 0 : index
      %43 = vector.load %arg13[%c0_31, %c0_32] : memref<32x128xf32, #tpu.memory_space<vmem>>, vector<32x128xf32>
      %cst_33 = arith.constant dense<0xFF800000> : vector<32xf32>
      %44 = vector.multi_reduction <maximumf>, %43, %cst_33 [1] : vector<32x128xf32> to vector<32xf32>
      %45 = vector.shape_cast %44 : vector<32xf32> to vector<32x1xf32>
      %c0_34 = arith.constant 0 : index
      %c0_35 = arith.constant 0 : index
      %c0_36 = arith.constant 0 : index
      %c0_37 = arith.constant 0 : index
      %46 = vector.load %arg12[%c0_34, %c0_35, %c0_36, %c0_37] : memref<1x1x32x1xf32, #tpu.memory_space<vmem>>, vector<1x1x32x1xf32>
      %47 = vector.shape_cast %46 : vector<1x1x32x1xf32> to vector<32x1xf32>
      %48 = vector.shape_cast %45 : vector<32x1xf32> to vector<1x1x32x1xf32>
      tpu.vector_store %arg12[%c0_34, %c0_35, %c0_36, %c0_37], %48 {strides = array<i32>} : memref<1x1x32x1xf32, #tpu.memory_space<vmem>>, vector<1x1x32x1xf32>,
    } else {
    }
    return
  }
  func.func @transform_0(%arg0: i32, %arg1: i32, %arg2: i32) -> (i32, i32, i32) {
    %c2_i32 = arith.constant 2 : i32
    %0 = arith.muli %arg1, %c2_i32 : i32
    %1 = arith.addi %0, %arg2 : i32
    %c0_i32 = arith.constant 0 : i32
    %c0_i32_0 = arith.constant 0 : i32
    return %arg0, %c0_i32, %1 : i32, i32, i32
  }
  func.func @transform_1(%arg0: i32, %arg1: i32, %arg2: i32) -> (i32, i32) {
    %c0_i32 = arith.constant 0 : i32
    %c0_i32_0 = arith.constant 0 : i32
    %c0_i32_1 = arith.constant 0 : i32
    return %c0_i32, %c0_i32_0 : i32, i32
  }
  func.func @transform_2(%arg0: i32, %arg1: i32, %arg2: i32) -> (i32, i32) {
    %c0_i32 = arith.constant 0 : i32
    %c0_i32_0 = arith.constant 0 : i32
    %c0_i32_1 = arith.constant 0 : i32
    return %c0_i32, %c0_i32_0 : i32, i32
  }
  func.func @transform_3(%arg0: i32, %arg1: i32, %arg2: i32) -> (i32, i32) {
    %c0_i32 = arith.constant 0 : i32
    %c0_i32_0 = arith.constant 0 : i32
    %c0_i32_1 = arith.constant 0 : i32
    return %c0_i32, %c0_i32_0 : i32, i32
  }
  func.func @transform_4(%arg0: i32, %arg1: i32, %arg2: i32) -> (i32, i32) {
    %c0_i32 = arith.constant 0 : i32
    %c0_i32_0 = arith.constant 0 : i32
    %c0_i32_1 = arith.constant 0 : i32
    return %c0_i32, %c0_i32_0 : i32, i32
  }
  func.func @transform_5(%arg0: i32, %arg1: i32, %arg2: i32) -> (i32, i32) {
    %c0_i32 = arith.constant 0 : i32
    %c0_i32_0 = arith.constant 0 : i32
    %c0_i32_1 = arith.constant 0 : i32
    return %c0_i32, %c0_i32_0 : i32, i32
  }
  func.func @transform_6(%arg0: i32, %arg1: i32, %arg2: i32) -> (i32, i32) {
    %c0_i32 = arith.constant 0 : i32
    %c0_i32_0 = arith.constant 0 : i32
    %c0_i32_1 = arith.constant 0 : i32
    return %c0_i32, %c0_i32_0 : i32, i32
  }
  func.func @transform_7(%arg0: i32, %arg1: i32, %arg2: i32) -> (i32, i32) {
    %c0_i32 = arith.constant 0 : i32
    %c0_i32_0 = arith.constant 0 : i32
    %c0_i32_1 = arith.constant 0 : i32
    return %c0_i32, %c0_i32_0 : i32, i32
  }
  func.func @transform_8(%arg0: i32, %arg1: i32, %arg2: i32) -> (i32, i32) {
    %c0_i32 = arith.constant 0 : i32
    %c0_i32_0 = arith.constant 0 : i32
    %c0_i32_1 = arith.constant 0 : i32
    return %c0_i32, %c0_i32_0 : i32, i32
  }
  func.func @transform_9(%arg0: i32, %arg1: i32, %arg2: i32) -> (i32, i32, i32, i32) {
    %c0_i32 = arith.constant 0 : i32
    %c0_i32_0 = arith.constant 0 : i32
    %c0_i32_1 = arith.constant 0 : i32
    return %arg0, %arg1, %c0_i32, %c0_i32_0 : i32, i32, i32, i32
  }
}

</mosaic_0001>

<llo_original>
// kernel: tpu_custom_call.1
$region0: #{tpu_custom_call.1}
  #allocation0 [shape = 'u32[]', space=smem, size = 0x4, offset = 0x4, fixed_abs, tag = 'smem constant byte address 0x4 - core index']
  #allocation1 [shape = 'u32[144,128]{1,0:T(1,128)}', space=vmem, size = 0x12000, scoped, tag = 'internal scratch']
  #allocation2 [shape = 'f32[32,128]{1,0:T(8,128)}', space=vmem, size = 0x4000, scoped, tag = 'scratch operand']
  %s0 = inlined_call_operand.vmem [shape: f32[2,3,512], index: 0, kind: input, shape index: {}]
  %s1 = inlined_call_operand.vmem [shape: bf16[8,3], index: 1, kind: input, shape index: {}]
  %s2 = inlined_call_operand.vmem [shape: f32[8,1], index: 2, kind: input, shape index: {}]
  %s3 = inlined_call_operand.vmem [shape: bf16[16,8], index: 3, kind: input, shape index: {}]
  %s4 = inlined_call_operand.vmem [shape: f32[16,1], index: 4, kind: input, shape index: {}]
  %s5 = inlined_call_operand.vmem [shape: bf16[16,16], index: 5, kind: input, shape index: {}]
  %s6 = inlined_call_operand.vmem [shape: f32[16,1], index: 6, kind: input, shape index: {}]
  %s7 = inlined_call_operand.vmem [shape: bf16[32,16], index: 7, kind: input, shape index: {}]
  %s8 = inlined_call_operand.vmem [shape: f32[32,1], index: 8, kind: input, shape index: {}]
  %s9 = inlined_call_operand.vmem [shape: f32[2,2,32,1], index: 9, kind: output, shape index: {}]
  %s10 = sld [smem:[#allocation0]]
  $region77: #{tpu_custom_call.1} parent=0
    _
  %s12 = ssub.s32 1, %s10
  %s13 = scalar_select 0, %s12, %s10
  loop: start=0, step=1, limit=10
  $region2: #{tpu_custom_call.1} parent=0 // loop_pre_header
    _
  $region3: #{tpu_custom_call.1} parent=0 // loop_header
    %s15 = sphi 0, %s19
    %p16 = scmp.ge.s32.totalorder %s15, 10
    %s22 = sphi 0, %s41
    %s23 = sphi 0, %s37
    %s24 = sphi 0, %s33
    %s25 = sphi 0, %s22
    %s26 = sphi 0, %s23
    %s27 = sphi 0, %s24
    %s28 = sphi 0, %s25
    %s29 = sphi 0, %s26
    %s30 = sphi 0, %s27
    %s50 = sphi 0, %s52
    %s53 = sphi 0, %s50
    %s54 = sphi 0, %s53
    %s70 = sphi 0, %s54
    %s74 = sphi 0, %s74
    %s76 = sphi 0, %s74
    %s77 = sphi 0, %s76
    %s91 = sphi 0, %s77
    %s95 = sphi 0, %s95
    %s97 = sphi 0, %s95
    %s98 = sphi 0, %s97
    %s112 = sphi 0, %s98
    %s116 = sphi 0, %s116
    %s118 = sphi 0, %s116
    %s119 = sphi 0, %s118
    %s133 = sphi 0, %s119
    %s137 = sphi 0, %s137
    %s139 = sphi 0, %s137
    %s140 = sphi 0, %s139
    %s154 = sphi 0, %s140
    %s158 = sphi 0, %s158
    %s160 = sphi 0, %s158
    %s161 = sphi 0, %s160
    %s175 = sphi 0, %s161
    %s179 = sphi 0, %s179
    %s181 = sphi 0, %s179
    %s182 = sphi 0, %s181
    %s196 = sphi 0, %s182
    %s200 = sphi 0, %s200
    %s202 = sphi 0, %s200
    %s203 = sphi 0, %s202
    %s217 = sphi 0, %s203
    %s221 = sphi 0, %s221
    %s223 = sphi 0, %s221
    %s224 = sphi 0, %s223
    %s238 = sphi 0, %s224
    %s246 = sphi 0, %s248
    %s249 = sphi 0, %s246
    %s250 = sphi 0, %s249
    %s266 = sphi 0, %s250
  $region4: #{tpu_custom_call.1} parent=0 // loop_header_branch
    %18 = sbr.rel (%p16) target = $region8
  $region5: #{tpu_custom_call.1} parent=0 // loop_body
    %s20 = ssub.s32 %s15, 1
    %s21 = ssub.s32 %s15, 2
    %s31 = sadd.s32 1, %s24
    %p32 = scmp.ge.s32.totalorder %s31, 2
    %s33 = scalar_select %p32, 0, %s31
    %s34 = sadd.s32 1, %s23
    %s35 = scalar_select %p32, %s34, %s23
    %p36 = scmp.ge.s32.totalorder %s35, 2
    %s37 = scalar_select %p36, 0, %s35
    %s38 = sadd.s32 1, %s22
    %s39 = scalar_select %p36, %s38, %s22
    %p40 = scmp.ge.s32.totalorder %s39, 2
    %s41 = scalar_select %p40, 0, %s39
    %s42 = smul.u32 %s23, 2
    %s43 = sadd.s32 %s42, %s24
    %s44 = smul.u32 %s37, 2
    %s45 = sadd.s32 %s44, %s33
    %s46 = ssub.s32 %s22, %s41
    %s47 = ssub.s32 %s43, %s45
    %s48 = sor.u32 %s46, %s47
    %p49 = scmp.eq.s32.totalorder %s48, 0
    %s51 = sadd.s32 %s50, 1
    %s52 = scalar_select %p49, %s50, %s51
    %p55 = pneg %p49
    %p56 = scmp.eq.s32.totalorder %s15, 7
    %p57 = por %p55, %p56
    %p58 = scmp.ne.s32.totalorder %s50, %s53
    %p59 = scmp.eq.s32.totalorder %s15, 0
    %p60 = por %p58, %p59
    %p61 = scmp.ne.s32.totalorder %s50, %s53
    %p62 = scmp.eq.s32.totalorder %s20, 7
    %p63 = por %p61, %p62
    %p64 = scmp.ne.s32.totalorder %s53, %s54
    %p65 = scmp.eq.s32.totalorder %s20, 0
    %p66 = por %p64, %p65
    %p67 = scmp.ne.s32.totalorder %s53, %s54
    %p68 = scmp.eq.s32.totalorder %s21, 7
    %p69 = por %p67, %p68
    %p71 = scmp.ne.s32.totalorder %s54, %s70
    %p72 = scmp.eq.s32.totalorder %s21, 0
    %p73 = por %p71, %p72
    %s75 = sadd.s32 %s74, 1
    %p78 = scmp.eq.s32.totalorder %s15, 7
    %p79 = scmp.ne.s32.totalorder %s74, %s76
    %p80 = scmp.eq.s32.totalorder %s15, 0
    %p81 = por %p79, %p80
    %p82 = scmp.ne.s32.totalorder %s74, %s76
    %p83 = scmp.eq.s32.totalorder %s20, 7
    %p84 = por %p82, %p83
    %p85 = scmp.ne.s32.totalorder %s76, %s77
    %p86 = scmp.eq.s32.totalorder %s20, 0
    %p87 = por %p85, %p86
    %p88 = scmp.ne.s32.totalorder %s76, %s77
    %p89 = scmp.eq.s32.totalorder %s21, 7
    %p90 = por %p88, %p89
    %p92 = scmp.ne.s32.totalorder %s77, %s91
    %p93 = scmp.eq.s32.totalorder %s21, 0
    %p94 = por %p92, %p93
    %s96 = sadd.s32 %s95, 1
    %p99 = scmp.eq.s32.totalorder %s15, 7
    %p100 = scmp.ne.s32.totalorder %s95, %s97
    %p101 = scmp.eq.s32.totalorder %s15, 0
    %p102 = por %p100, %p101
    %p103 = scmp.ne.s32.totalorder %s95, %s97
    %p104 = scmp.eq.s32.totalorder %s20, 7
    %p105 = por %p103, %p104
    %p106 = scmp.ne.s32.totalorder %s97, %s98
    %p107 = scmp.eq.s32.totalorder %s20, 0
    %p108 = por %p106, %p107
    %p109 = scmp.ne.s32.totalorder %s97, %s98
    %p110 = scmp.eq.s32.totalorder %s21, 7
    %p111 = por %p109, %p110
    %p113 = scmp.ne.s32.totalorder %s98, %s112
    %p114 = scmp.eq.s32.totalorder %s21, 0
    %p115 = por %p113, %p114
    %s117 = sadd.s32 %s116, 1
    %p120 = scmp.eq.s32.totalorder %s15, 7
    %p121 = scmp.ne.s32.totalorder %s116, %s118
    %p122 = scmp.eq.s32.totalorder %s15, 0
    %p123 = por %p121, %p122
    %p124 = scmp.ne.s32.totalorder %s116, %s118
    %p125 = scmp.eq.s32.totalorder %s20, 7
    %p126 = por %p124, %p125
    %p127 = scmp.ne.s32.totalorder %s118, %s119
    %p128 = scmp.eq.s32.totalorder %s20, 0
    %p129 = por %p127, %p128
    %p130 = scmp.ne.s32.totalorder %s118, %s119
    %p131 = scmp.eq.s32.totalorder %s21, 7
    %p132 = por %p130, %p131
    %p134 = scmp.ne.s32.totalorder %s119, %s133
    %p135 = scmp.eq.s32.totalorder %s21, 0
    %p136 = por %p134, %p135
    %s138 = sadd.s32 %s137, 1
    %p141 = scmp.eq.s32.totalorder %s15, 7
    %p142 = scmp.ne.s32.totalorder %s137, %s139
    %p143 = scmp.eq.s32.totalorder %s15, 0
    %p144 = por %p142, %p143
    %p145 = scmp.ne.s32.totalorder %s137, %s139
    %p146 = scmp.eq.s32.totalorder %s20, 7
    %p147 = por %p145, %p146
    %p148 = scmp.ne.s32.totalorder %s139, %s140
    %p149 = scmp.eq.s32.totalorder %s20, 0
    %p150 = por %p148, %p149
    %p151 = scmp.ne.s32.totalorder %s139, %s140
    %p152 = scmp.eq.s32.totalorder %s21, 7
    %p153 = por %p151, %p152
    %p155 = scmp.ne.s32.totalorder %s140, %s154
    %p156 = scmp.eq.s32.totalorder %s21, 0
    %p157 = por %p155, %p156
    %s159 = sadd.s32 %s158, 1
    %p162 = scmp.eq.s32.totalorder %s15, 7
    %p163 = scmp.ne.s32.totalorder %s158, %s160
    %p164 = scmp.eq.s32.totalorder %s15, 0
    %p165 = por %p163, %p164
    %p166 = scmp.ne.s32.totalorder %s158, %s160
    %p167 = scmp.eq.s32.totalorder %s20, 7
    %p168 = por %p166, %p167
    %p169 = scmp.ne.s32.totalorder %s160, %s161
    %p170 = scmp.eq.s32.totalorder %s20, 0
    %p171 = por %p169, %p170
    %p172 = scmp.ne.s32.totalorder %s160, %s161
    %p173 = scmp.eq.s32.totalorder %s21, 7
    %p174 = por %p172, %p173
    %p176 = scmp.ne.s32.totalorder %s161, %s175
    %p177 = scmp.eq.s32.totalorder %s21, 0
    %p178 = por %p176, %p177
    %s180 = sadd.s32 %s179, 1
    %p183 = scmp.eq.s32.totalorder %s15, 7
    %p184 = scmp.ne.s32.totalorder %s179, %s181
    %p185 = scmp.eq.s32.totalorder %s15, 0
    %p186 = por %p184, %p185
    %p187 = scmp.ne.s32.totalorder %s179, %s181
    %p188 = scmp.eq.s32.totalorder %s20, 7
    %p189 = por %p187, %p188
    %p190 = scmp.ne.s32.totalorder %s181, %s182
    %p191 = scmp.eq.s32.totalorder %s20, 0
    %p192 = por %p190, %p191
    %p193 = scmp.ne.s32.totalorder %s181, %s182
    %p194 = scmp.eq.s32.totalorder %s21, 7
    %p195 = por %p193, %p194
    %p197 = scmp.ne.s32.totalorder %s182, %s196
    %p198 = scmp.eq.s32.totalorder %s21, 0
    %p199 = por %p197, %p198
    %s201 = sadd.s32 %s200, 1
    %p204 = scmp.eq.s32.totalorder %s15, 7
    %p205 = scmp.ne.s32.totalorder %s200, %s202
    %p206 = scmp.eq.s32.totalorder %s15, 0
    %p207 = por %p205, %p206
    %p208 = scmp.ne.s32.totalorder %s200, %s202
    %p209 = scmp.eq.s32.totalorder %s20, 7
    %p210 = por %p208, %p209
    %p211 = scmp.ne.s32.totalorder %s202, %s203
    %p212 = scmp.eq.s32.totalorder %s20, 0
    %p213 = por %p211, %p212
    %p214 = scmp.ne.s32.totalorder %s202, %s203
    %p215 = scmp.eq.s32.totalorder %s21, 7
    %p216 = por %p214, %p215
    %p218 = scmp.ne.s32.totalorder %s203, %s217
    %p219 = scmp.eq.s32.totalorder %s21, 0
    %p220 = por %p218, %p219
    %s222 = sadd.s32 %s221, 1
    %p225 = scmp.eq.s32.totalorder %s15, 7
    %p226 = scmp.ne.s32.totalorder %s221, %s223
    %p227 = scmp.eq.s32.totalorder %s15, 0
    %p228 = por %p226, %p227
    %p229 = scmp.ne.s32.totalorder %s221, %s223
    %p230 = scmp.eq.s32.totalorder %s20, 7
    %p231 = por %p229, %p230
    %p232 = scmp.ne.s32.totalorder %s223, %s224
    %p233 = scmp.eq.s32.totalorder %s20, 0
    %p234 = por %p232, %p233
    %p235 = scmp.ne.s32.totalorder %s223, %s224
    %p236 = scmp.eq.s32.totalorder %s21, 7
    %p237 = por %p235, %p236
    %p239 = scmp.ne.s32.totalorder %s224, %s238
    %p240 = scmp.eq.s32.totalorder %s21, 0
    %p241 = por %p239, %p240
    %s242 = ssub.s32 %s22, %s41
    %s243 = ssub.s32 %s23, %s37
    %s244 = sor.u32 %s242, %s243
    %p245 = scmp.eq.s32.totalorder %s244, 0
    %s247 = sadd.s32 %s246, 1
    %s248 = scalar_select %p245, %s246, %s247
    %p251 = pneg %p245
    %p252 = scmp.eq.s32.totalorder %s15, 7
    %p253 = por %p251, %p252
    %p254 = scmp.ne.s32.totalorder %s246, %s249
    %p255 = scmp.eq.s32.totalorder %s15, 0
    %p256 = por %p254, %p255
    %p257 = scmp.ne.s32.totalorder %s246, %s249
    %p258 = scmp.eq.s32.totalorder %s20, 7
    %p259 = por %p257, %p258
    %p260 = scmp.ne.s32.totalorder %s249, %s250
    %p261 = scmp.eq.s32.totalorder %s20, 0
    %p262 = por %p260, %p261
    %p263 = scmp.ne.s32.totalorder %s249, %s250
    %p264 = scmp.eq.s32.totalorder %s21, 7
    %p265 = por %p263, %p264
    %p267 = scmp.ne.s32.totalorder %s250, %s266
    %p268 = scmp.eq.s32.totalorder %s21, 0
    %p269 = por %p267, %p268
    %p270 = scmp.le.s32.totalorder 1, %s15
    %p271 = scmp.lt.s32.totalorder %s15, 9
    %p272 = pnand %p270, %p271
    %p273 = pneg %p272
    // Predicated region
    $region9: #{tpu_custom_call.1} parent=5 // pred_check
      _
    $region10: #{tpu_custom_call.1} parent=5 // pred_check_branch
      %275 = sbr.rel (%p272) target = $region12
    $region11: #{tpu_custom_call.1} parent=5 // pred_region
      %s276 = ssub.s32 %s15, 1
      // Predicated region
      $region13: #{tpu_custom_call.1} parent=11 // pred_check
        %p277 = pneg %p87
      $region14: #{tpu_custom_call.1} parent=11 // pred_check_branch
        %279 = sbr.rel (%p277) target = $region16
      $region15: #{tpu_custom_call.1} parent=11 // pred_region
        _
      $region16: #{tpu_custom_call.1} parent=11 // pred_fallthru
        _
      // Predicated region
      $region17: #{tpu_custom_call.1} parent=11 // pred_check
        %p280 = pneg %p108
      $region18: #{tpu_custom_call.1} parent=11 // pred_check_branch
        %282 = sbr.rel (%p280) target = $region20
      $region19: #{tpu_custom_call.1} parent=11 // pred_region
        _
      $region20: #{tpu_custom_call.1} parent=11 // pred_fallthru
        _
      // Predicated region
      $region21: #{tpu_custom_call.1} parent=11 // pred_check
        %p283 = pneg %p129
      $region22: #{tpu_custom_call.1} parent=11 // pred_check_branch
        %285 = sbr.rel (%p283) target = $region24
      $region23: #{tpu_custom_call.1} parent=11 // pred_region
        _
      $region24: #{tpu_custom_call.1} parent=11 // pred_fallthru
        _
      // Predicated region
      $region25: #{tpu_custom_call.1} parent=11 // pred_check
        %p286 = pneg %p150
      $region26: #{tpu_custom_call.1} parent=11 // pred_check_branch
        %288 = sbr.rel (%p286) target = $region28
      $region27: #{tpu_custom_call.1} parent=11 // pred_region
        _
      $region28: #{tpu_custom_call.1} parent=11 // pred_fallthru
        _
      // Predicated region
      $region29: #{tpu_custom_call.1} parent=11 // pred_check
        %p289 = pneg %p171
      $region30: #{tpu_custom_call.1} parent=11 // pred_check_branch
        %291 = sbr.rel (%p289) target = $region32
      $region31: #{tpu_custom_call.1} parent=11 // pred_region
        _
      $region32: #{tpu_custom_call.1} parent=11 // pred_fallthru
        _
      // Predicated region
      $region33: #{tpu_custom_call.1} parent=11 // pred_check
        %p292 = pneg %p192
      $region34: #{tpu_custom_call.1} parent=11 // pred_check_branch
        %294 = sbr.rel (%p292) target = $region36
      $region35: #{tpu_custom_call.1} parent=11 // pred_region
        _
      $region36: #{tpu_custom_call.1} parent=11 // pred_fallthru
        _
      // Predicated region
      $region37: #{tpu_custom_call.1} parent=11 // pred_check
        %p295 = pneg %p213
      $region38: #{tpu_custom_call.1} parent=11 // pred_check_branch
        %297 = sbr.rel (%p295) target = $region40
      $region39: #{tpu_custom_call.1} parent=11 // pred_region
        _
      $region40: #{tpu_custom_call.1} parent=11 // pred_fallthru
        _
      // Predicated region
      $region41: #{tpu_custom_call.1} parent=11 // pred_check
        %p298 = pneg %p234
      $region42: #{tpu_custom_call.1} parent=11 // pred_check_branch
        %300 = sbr.rel (%p298) target = $region44
      $region43: #{tpu_custom_call.1} parent=11 // pred_region
        _
      $region44: #{tpu_custom_call.1} parent=11 // pred_fallthru
        _
    $region12: #{tpu_custom_call.1} parent=5 // pred_fallthru
      _
    %p301 = scmp.lt.s32.totalorder %s15, 8
    // Predicated region
    $region45: #{tpu_custom_call.1} parent=5 // pred_check
      %p302 = pneg %p301
    $region46: #{tpu_custom_call.1} parent=5 // pred_check_branch
      %304 = sbr.rel (%p302) target = $region48
    $region47: #{tpu_custom_call.1} parent=5 // pred_region
      // Predicated region
      $region49: #{tpu_custom_call.1} parent=47 // pred_check
        %p305 = pneg %p60
      $region50: #{tpu_custom_call.1} parent=47 // pred_check_branch
        %307 = sbr.rel (%p305) target = $region52
      $region51: #{tpu_custom_call.1} parent=47 // pred_region
        %s308 = smul.u32 %s23, 2
        %s309 = sadd.s32 %s308, %s24
        %p310 = scmp.lt.s32.totalorder %s22, 1
        %s311 = scalar_select %p310, %s22, 1
        %p312 = scmp.lt.s32.totalorder %s309, 3
        %s313 = scalar_select %p312, %s309, 3
        %s314 = smul.addr %s311, 4
        %s315 = sadd.s32 %s313, %s314
        %s316 = smul.addr %s315, 4
        %s317 = scalar_lea.vmem %s0, %s316
        %s318 = smul.u32 %s23, 2
        %s319 = sadd.s32 %s318, %s24
      $region52: #{tpu_custom_call.1} parent=47 // pred_fallthru
        _
    $region48: #{tpu_custom_call.1} parent=5 // pred_fallthru
      _
    %p320 = scmp.le.s32.totalorder 1, %s15
    %p321 = scmp.lt.s32.totalorder %s15, 9
    %p322 = pnand %p320, %p321
    %p323 = pneg %p322
    // Predicated region
    $region53: #{tpu_custom_call.1} parent=5 // pred_check
      _
    $region54: #{tpu_custom_call.1} parent=5 // pred_check_branch
      %325 = sbr.rel (%p322) target = $region56
    $region55: #{tpu_custom_call.1} parent=5 // pred_region
      %s326 = ssub.s32 %s15, 1
      %s327 = smul.u32 %s26, 2
      %s328 = sadd.s32 %s327, %s27
      %p329 = scmp.lt.s32.totalorder %s25, 1
      %s330 = scalar_select %p329, %s25, 1
      %p331 = scmp.lt.s32.totalorder %s328, 3
      %s332 = scalar_select %p331, %s328, 3
      %s333 = smul.addr %s330, 4
      %s334 = sadd.s32 %s332, %s333
      %s335 = smul.addr %s334, 4
      %s336 = scalar_lea.vmem %s0, %s335
      %p337 = pneg %p66
      %p338 = pneg %p63
      %p339 = pneg %p87
      %p340 = pneg %p84
      %p341 = pneg %p108
      %p342 = pneg %p105
      %p343 = pneg %p129
      %p344 = pneg %p126
      %p345 = pneg %p150
      %p346 = pneg %p147
      %p347 = pneg %p171
      %p348 = pneg %p168
      %p349 = pneg %p192
      %p350 = pneg %p189
      %p351 = pneg %p213
      %p352 = pneg %p210
      %p353 = pneg %p234
      %p354 = pneg %p231
      %p355 = pneg %p262
      %p356 = pneg %p259
      %p357 = scmp.lt.s32.totalorder %s25, 1
      %s358 = scalar_select %p357, %s25, 1
      %p359 = scmp.lt.s32.totalorder %s26, 1
      %s360 = scalar_select %p359, %s26, 1
      %s361 = smul.addr %s360, 4
      %s362 = smul.addr %s358, 8
      %s363 = sadd.s32 %s361, %s362
      %s364 = smul.addr %s363, 8
      %s365 = scalar_lea.vmem %s9, %s364
      %s366 = smul.u32 %s26, 2
      %s367 = sadd.s32 %s366, %s27
      %p368 = scmp.lt.s32.totalorder %s25, 1
      %s369 = scalar_select %p368, %s25, 1
      %p370 = scmp.lt.s32.totalorder %s367, 3
      %s371 = scalar_select %p370, %s367, 3
      %s372 = smul.addr %s369, 4
      %s373 = sadd.s32 %s371, %s372
      %s374 = smul.addr %s373, 4
      %s375 = scalar_lea.vmem %s0, %s374
      %s376 = smul.u32 %s26, 2
      %s377 = sadd.s32 %s376, %s27
      %p378 = scmp.lt.s32.totalorder %s25, 1
      %s379 = scalar_select %p378, %s25, 1
      %p380 = scmp.lt.s32.totalorder %s26, 1
      %s381 = scalar_select %p380, %s26, 1
      %s382 = smul.addr %s381, 4
      %s383 = smul.addr %s379, 8
      %s384 = sadd.s32 %s382, %s383
      %s385 = smul.addr %s384, 8
      %s386 = scalar_lea.vmem %s9, %s385
      %p388 = scmp.eq.s32.totalorder %s27, 0
      // Predicated region
      $region57: #{tpu_custom_call.1} parent=55 // pred_check
        %p389 = pneg %p388
      $region58: #{tpu_custom_call.1} parent=55 // pred_check_branch
        %391 = sbr.rel (%p389) target = $region60
      $region59: #{tpu_custom_call.1} parent=55 // pred_region
        %392 = vst [vmem:[#allocation2] sm:$0xff] -inf
        %393 = vst [vmem:[#allocation2 + $0x8] sm:$0xff] -inf
        %394 = vst [vmem:[#allocation2 + $0x10] sm:$0xff] -inf
        %395 = vst [vmem:[#allocation2 + $0x18] sm:$0xff] -inf
      $region60: #{tpu_custom_call.1} parent=55 // pred_fallthru
        _
      %v396 = vld [vmem:[%s375] sm:$0x7]
      %v397 = vpack.c.bf16 %v396, %v396
      %v398 = vld [vmem:[#allocation2] sm:$0xff]
      %v399 = vld [vmem:[#allocation2 + $0x8] sm:$0xff]
      %v400 = vld [vmem:[#allocation2 + $0x10] sm:$0xff]
      %v401 = vld [vmem:[#allocation2 + $0x18] sm:$0xff]
      %v402 = vld [vmem:[%s1] sm:$0xf]
      %v403 = vld [vmem:[%s2] sm:$0xff]
      %405 = vset.pattern.permute.xlu0 0
      %406 = vperm.xlu0 %405, %v403
      %v407 = vpop.permute.xlu0 %406
      %vm409 = vcmask 23552
      %v411 = vsel %vm409, %v402, 0
      %vm413 = vcmask 1040384
      %vm414 = vcmask 1041408
      %v415 = vsel %vm413, 4294967295, 65535
      %v416 = vsel %vm414, %v415, 0
      %v418 = vand.u32 %v397, %v416
      %420 = vmatprep.subr.bf16.mxu0 0
      %421 = vmatpush1.bf16.msra.mxu0 %v418
      %422 = vmatprep.subr.bf16.mxu0 0
      %423 = vmatpush1.bf16.msra.mxu0 0
      %424 = vmatprep.subr.bf16.mxu0 0
      %425 = vmatpush1.bf16.msra.mxu0 0
      %426 = vmatprep.subr.bf16.mxu0 0
      %427 = vmatpush1.bf16.msra.mxu0 0
      %428 = vmatprep.subr.bf16.mxu0 0
      %429 = vmatpush1.bf16.msra.mxu0 0
      %430 = vmatprep.subr.bf16.mxu0 0
      %431 = vmatpush1.bf16.msra.mxu0 0
      %432 = vmatprep.subr.bf16.mxu0 0
      %433 = vmatpush1.bf16.msra.mxu0 0
      %434 = vmatprep.subr.bf16.mxu0 0
      %435 = vmatpush1.bf16.msra.mxu0 0
      %436 = vmatprep.subr.bf16.mxu0 0
      %437 = vmatpush1.bf16.msra.mxu0 0
      %438 = vmatprep.subr.bf16.mxu0 0
      %439 = vmatpush1.bf16.msra.mxu0 0
      %440 = vmatprep.subr.bf16.mxu0 0
      %441 = vmatpush1.bf16.msra.mxu0 0
      %442 = vmatprep.subr.bf16.mxu0 0
      %443 = vmatpush1.bf16.msra.mxu0 0
      %444 = vmatprep.subr.bf16.mxu0 0
      %445 = vmatpush1.bf16.msra.mxu0 0
      %446 = vmatprep.subr.bf16.mxu0 0
      %447 = vmatpush1.bf16.msra.mxu0 0
      %448 = vmatprep.subr.bf16.mxu0 0
      %449 = vmatpush1.bf16.msra.mxu0 0
      %450 = vmatprep.subr.bf16.mxu0 0
      %451 = vmatpush1.bf16.msra.mxu0 0
      %452 = vmatprep.mubr.bf16.mxu0 0
      %453 = vmatmul.mubr.bf16.gmra.mrb[0].mxu0 %v411
      %v454 = vpop.f32.mrb[0].mxu0
      %v455 = vadd.f32 %v407, %v454
      %v456 = vpop.f32.mrb[0].mxu0
      %v457 = vpop.f32.mrb[0].mxu0
      %v458 = vpop.f32.mrb[0].mxu0
      %459 = vdwg.mxu0
      %v460 = vmax.f32 %v455, 0.0
      %v461 = vpack.c.bf16 %v460, %v460
      %v462 = vld [vmem:[%s3] sm:$0xf]
      %v463 = vld [vmem:[%s3 + $0x4] sm:$0xf]
      %v464 = vld [vmem:[%s4] sm:$0xff]
      %v465 = vld [vmem:[%s4 + $0x8] sm:$0xff]
      %467 = vset.pattern.permute.xlu0 0
      %468 = vperm.xlu0 %467, %v464
      %v469 = vpop.permute.xlu0 %468
      %472 = vset.pattern.permute.xlu0 0
      %473 = vperm.xlu0 %472, %v465
      %v474 = vpop.permute.xlu0 %473
      %v478 = vunpack.c.l.b16 %v462
      %v479 = vunpack.c.l.b16 %v463
      %v480 = vpack.c.b16 %v479, %v478
      %vm481 = vcmask 64512
      %v483 = vsel %vm481, %v480, 0
      %vm485 = vcmask 1043456
      %v487 = vsel %vm485, %v461, 0
      %489 = vmatprep.subr.bf16.mxu0 0
      %490 = vmatpush1.bf16.msra.mxu0 %v487
      %491 = vmatprep.subr.bf16.mxu0 0
      %492 = vmatpush1.bf16.msra.mxu0 0
      %493 = vmatprep.subr.bf16.mxu0 0
      %494 = vmatpush1.bf16.msra.mxu0 0
      %495 = vmatprep.subr.bf16.mxu0 0
      %496 = vmatpush1.bf16.msra.mxu0 0
      %497 = vmatprep.subr.bf16.mxu0 0
      %498 = vmatpush1.bf16.msra.mxu0 0
      %499 = vmatprep.subr.bf16.mxu0 0
      %500 = vmatpush1.bf16.msra.mxu0 0
      %501 = vmatprep.subr.bf16.mxu0 0
      %502 = vmatpush1.bf16.msra.mxu0 0
      %503 = vmatprep.subr.bf16.mxu0 0
      %504 = vmatpush1.bf16.msra.mxu0 0
      %505 = vmatprep.subr.bf16.mxu0 0
      %506 = vmatpush1.bf16.msra.mxu0 0
      %507 = vmatprep.subr.bf16.mxu0 0
      %508 = vmatpush1.bf16.msra.mxu0 0
      %509 = vmatprep.subr.bf16.mxu0 0
      %510 = vmatpush1.bf16.msra.mxu0 0
      %511 = vmatprep.subr.bf16.mxu0 0
      %512 = vmatpush1.bf16.msra.mxu0 0
      %513 = vmatprep.subr.bf16.mxu0 0
      %514 = vmatpush1.bf16.msra.mxu0 0
      %515 = vmatprep.subr.bf16.mxu0 0
      %516 = vmatpush1.bf16.msra.mxu0 0
      %517 = vmatprep.subr.bf16.mxu0 0
      %518 = vmatpush1.bf16.msra.mxu0 0
      %519 = vmatprep.subr.bf16.mxu0 0
      %520 = vmatpush1.bf16.msra.mxu0 0
      %521 = vmatprep.mubr.bf16.mxu0 0
      %522 = vmatmul.mubr.bf16.gmra.mrb[0].mxu0 %v483
      %v523 = vpop.f32.mrb[0].mxu0
      %v524 = vadd.f32 %v469, %v523
      %v525 = vpop.f32.mrb[0].mxu0
      %v526 = vpop.f32.mrb[0].mxu0
      %v527 = vadd.f32 %v474, %v526
      %v528 = vpop.f32.mrb[0].mxu0
      %529 = vdwg.mxu0
      %v530 = vmax.f32 %v524, 0.0
      %v531 = vmax.f32 %v527, 0.0
      %v532 = vpack.c.bf16 %v531, %v530
      %v533 = vld [vmem:[%s5] sm:$0xf]
      %v534 = vld [vmem:[%s5 + $0x4] sm:$0xf]
      %v535 = vld [vmem:[%s6] sm:$0xff]
      %v536 = vld [vmem:[%s6 + $0x8] sm:$0xff]
      %538 = vset.pattern.permute.xlu0 0
      %539 = vperm.xlu0 %538, %v535
      %v540 = vpop.permute.xlu0 %539
      %543 = vset.pattern.permute.xlu0 0
      %544 = vperm.xlu0 %543, %v536
      %v545 = vpop.permute.xlu0 %544
      %v549 = vunpack.c.l.b16 %v533
      %v550 = vunpack.c.l.b16 %v534
      %v551 = vpack.c.b16 %v550, %v549
      %vm552 = vcmask 130048
      %v554 = vsel %vm552, %v551, 0
      %556 = vmatprep.subr.bf16.mxu0 0
      %557 = vmatpush1.bf16.msra.mxu0 %v532
      %558 = vmatprep.subr.bf16.mxu0 0
      %559 = vmatpush1.bf16.msra.mxu0 0
      %560 = vmatprep.subr.bf16.mxu0 0
      %561 = vmatpush1.bf16.msra.mxu0 0
      %562 = vmatprep.subr.bf16.mxu0 0
      %563 = vmatpush1.bf16.msra.mxu0 0
      %564 = vmatprep.subr.bf16.mxu0 0
      %565 = vmatpush1.bf16.msra.mxu0 0
      %566 = vmatprep.subr.bf16.mxu0 0
      %567 = vmatpush1.bf16.msra.mxu0 0
      %568 = vmatprep.subr.bf16.mxu0 0
      %569 = vmatpush1.bf16.msra.mxu0 0
      %570 = vmatprep.subr.bf16.mxu0 0
      %571 = vmatpush1.bf16.msra.mxu0 0
      %572 = vmatprep.subr.bf16.mxu0 0
      %573 = vmatpush1.bf16.msra.mxu0 0
      %574 = vmatprep.subr.bf16.mxu0 0
      %575 = vmatpush1.bf16.msra.mxu0 0
      %576 = vmatprep.subr.bf16.mxu0 0
      %577 = vmatpush1.bf16.msra.mxu0 0
      %578 = vmatprep.subr.bf16.mxu0 0
      %579 = vmatpush1.bf16.msra.mxu0 0
      %580 = vmatprep.subr.bf16.mxu0 0
      %581 = vmatpush1.bf16.msra.mxu0 0
      %582 = vmatprep.subr.bf16.mxu0 0
      %583 = vmatpush1.bf16.msra.mxu0 0
      %584 = vmatprep.subr.bf16.mxu0 0
      %585 = vmatpush1.bf16.msra.mxu0 0
      %586 = vmatprep.subr.bf16.mxu0 0
      %587 = vmatpush1.bf16.msra.mxu0 0
      %588 = vmatprep.mubr.bf16.mxu0 0
      %589 = vmatmul.mubr.bf16.gmra.mrb[0].mxu0 %v554
      %v590 = vpop.f32.mrb[0].mxu0
      %v591 = vadd.f32 %v540, %v590
      %v592 = vpop.f32.mrb[0].mxu0
      %v593 = vpop.f32.mrb[0].mxu0
      %v594 = vadd.f32 %v545, %v593
      %v595 = vpop.f32.mrb[0].mxu0
      %596 = vdwg.mxu0
      %v597 = vmax.f32 %v591, 0.0
      %v598 = vmax.f32 %v594, 0.0
      %v599 = vpack.c.bf16 %v598, %v597
      %v600 = vld [vmem:[%s7] sm:$0xf]
      %v601 = vld [vmem:[%s7 + $0x4] sm:$0xf]
      %v602 = vld [vmem:[%s7 + $0x8] sm:$0xf]
      %v603 = vld [vmem:[%s7 + $0xc] sm:$0xf]
      %v604 = vld [vmem:[%s8] sm:$0xff]
      %v605 = vld [vmem:[%s8 + $0x8] sm:$0xff]
      %v606 = vld [vmem:[%s8 + $0x10] sm:$0xff]
      %v607 = vld [vmem:[%s8 + $0x18] sm:$0xff]
      %609 = vset.pattern.permute.xlu0 0
      %610 = vperm.xlu0 %609, %v604
      %v611 = vpop.permute.xlu0 %610
      %614 = vset.pattern.permute.xlu0 0
      %615 = vperm.xlu0 %614, %v605
      %v616 = vpop.permute.xlu0 %615
      %619 = vset.pattern.permute.xlu0 0
      %620 = vperm.xlu0 %619, %v606
      %v621 = vpop.permute.xlu0 %620
      %624 = vset.pattern.permute.xlu0 0
      %625 = vperm.xlu0 %624, %v607
      %v626 = vpop.permute.xlu0 %625
      %v632 = vunpack.c.l.b16 %v600
      %v633 = vunpack.c.l.b16 %v601
      %v634 = vunpack.c.l.b16 %v602
      %v635 = vunpack.c.l.b16 %v603
      %v636 = vpack.c.b16 %v633, %v632
      %v637 = vpack.c.b16 %v635, %v634
      %v639 = vsel %vm552, %v636, 0
      %v642 = vsel %vm552, %v637, 0
      %644 = vmatprep.subr.bf16.mxu0 0
      %645 = vmatpush1.bf16.msra.mxu0 %v599
      %646 = vmatprep.subr.bf16.mxu0 0
      %647 = vmatpush1.bf16.msra.mxu0 0
      %648 = vmatprep.subr.bf16.mxu0 0
      %649 = vmatpush1.bf16.msra.mxu0 0
      %650 = vmatprep.subr.bf16.mxu0 0
      %651 = vmatpush1.bf16.msra.mxu0 0
      %652 = vmatprep.subr.bf16.mxu0 0
      %653 = vmatpush1.bf16.msra.mxu0 0
      %654 = vmatprep.subr.bf16.mxu0 0
      %655 = vmatpush1.bf16.msra.mxu0 0
      %656 = vmatprep.subr.bf16.mxu0 0
      %657 = vmatpush1.bf16.msra.mxu0 0
      %658 = vmatprep.subr.bf16.mxu0 0
      %659 = vmatpush1.bf16.msra.mxu0 0
      %660 = vmatprep.subr.bf16.mxu0 0
      %661 = vmatpush1.bf16.msra.mxu0 0
      %662 = vmatprep.subr.bf16.mxu0 0
      %663 = vmatpush1.bf16.msra.mxu0 0
      %664 = vmatprep.subr.bf16.mxu0 0
      %665 = vmatpush1.bf16.msra.mxu0 0
      %666 = vmatprep.subr.bf16.mxu0 0
      %667 = vmatpush1.bf16.msra.mxu0 0
      %668 = vmatprep.subr.bf16.mxu0 0
      %669 = vmatpush1.bf16.msra.mxu0 0
      %670 = vmatprep.subr.bf16.mxu0 0
      %671 = vmatpush1.bf16.msra.mxu0 0
      %672 = vmatprep.subr.bf16.mxu0 0
      %673 = vmatpush1.bf16.msra.mxu0 0
      %674 = vmatprep.subr.bf16.mxu0 0
      %675 = vmatpush1.bf16.msra.mxu0 0
      %676 = vmatprep.mubr.bf16.mxu0 0
      %677 = vmatmul.mubr.bf16.gmra.mrb[0].mxu0 %v639
      %v678 = vpop.f32.mrb[0].mxu0
      %v679 = vadd.f32 %v611, %v678
      %v680 = vpop.f32.mrb[0].mxu0
      %v681 = vpop.f32.mrb[0].mxu0
      %v682 = vadd.f32 %v616, %v681
      %v683 = vpop.f32.mrb[0].mxu0
      %684 = vmatprep.mubr.bf16.mxu0 0
      %685 = vmatmul.mubr.bf16.gmra.mrb[0].mxu0 %v642
      %v686 = vpop.f32.mrb[0].mxu0
      %v687 = vadd.f32 %v621, %v686
      %v688 = vpop.f32.mrb[0].mxu0
      %v689 = vpop.f32.mrb[0].mxu0
      %v690 = vadd.f32 %v626, %v689
      %v691 = vpop.f32.mrb[0].mxu0
      %692 = vdwg.mxu0
      %v693 = vmax.f32 %v679, 0.0
      %v694 = vmax.f32 %v682, 0.0
      %v695 = vmax.f32 %v687, 0.0
      %v696 = vmax.f32 %v690, 0.0
      %v697 = vmax.f32 %v398, %v693
      %v698 = vmax.f32 %v399, %v694
      %v699 = vmax.f32 %v400, %v695
      %v700 = vmax.f32 %v401, %v696
      %701 = vst [vmem:[#allocation2] sm:$0xff] %v697
      %702 = vst [vmem:[#allocation2 + $0x8] sm:$0xff] %v698
      %703 = vst [vmem:[#allocation2 + $0x10] sm:$0xff] %v699
      %704 = vst [vmem:[#allocation2 + $0x18] sm:$0xff] %v700
      %p705 = scmp.eq.s32.totalorder %s27, 1
      // Predicated region
      $region61: #{tpu_custom_call.1} parent=55 // pred_check
        %p706 = pneg %p705
      $region62: #{tpu_custom_call.1} parent=55 // pred_check_branch
        %708 = sbr.rel (%p706) target = $region64
      $region63: #{tpu_custom_call.1} parent=55 // pred_region
        %v709 = vld [vmem:[#allocation2] sm:$0xff]
        %v710 = vld [vmem:[#allocation2 + $0x8] sm:$0xff]
        %v711 = vld [vmem:[#allocation2 + $0x10] sm:$0xff]
        %v712 = vld [vmem:[#allocation2 + $0x18] sm:$0xff]
        %713 = vmax.xlane.f32.xlu0 %v709
        %v714 = vpop.xlane.xlu0 %713
        %715 = vmax.xlane.f32.xlu0 %v710
        %v716 = vpop.xlane.xlu0 %715
        %717 = vmax.xlane.f32.xlu0 %v711
        %v718 = vpop.xlane.xlu0 %717
        %719 = vmax.xlane.f32.xlu0 %v712
        %v720 = vpop.xlane.xlu0 %719
        %vm721 = vcmask 7168
        %722 = vst.msk [vmem:[%s386] sm:$0xff] %vm721, %v714
        %723 = vst.msk [vmem:[%s386 + $0x8] sm:$0xff] %vm721, %v716
        %724 = vst.msk [vmem:[%s386 + $0x10] sm:$0xff] %vm721, %v718
        %725 = vst.msk [vmem:[%s386 + $0x18] sm:$0xff] %vm721, %v720
      $region64: #{tpu_custom_call.1} parent=55 // pred_fallthru
        _
      %p726 = scmp.lt.s32.totalorder %s25, 1
      %s727 = scalar_select %p726, %s25, 1
      %p728 = scmp.lt.s32.totalorder %s26, 1
      %s729 = scalar_select %p728, %s26, 1
      %s730 = smul.addr %s729, 4
      %s731 = smul.addr %s727, 8
      %s732 = sadd.s32 %s730, %s731
      %s733 = smul.addr %s732, 8
      %s734 = scalar_lea.vmem %s9, %s733
      // Predicated region
      $region65: #{tpu_custom_call.1} parent=55 // pred_check
        %p735 = pneg %p259
      $region66: #{tpu_custom_call.1} parent=55 // pred_check_branch
        %737 = sbr.rel (%p735) target = $region68
      $region67: #{tpu_custom_call.1} parent=55 // pred_region
        _
      $region68: #{tpu_custom_call.1} parent=55 // pred_fallthru
        _
    $region56: #{tpu_custom_call.1} parent=5 // pred_fallthru
      _
    %p738 = scmp.le.s32.totalorder 2, %s15
    // Predicated region
    $region69: #{tpu_custom_call.1} parent=5 // pred_check
      %p739 = pneg %p738
    $region70: #{tpu_custom_call.1} parent=5 // pred_check_branch
      %741 = sbr.rel (%p739) target = $region72
    $region71: #{tpu_custom_call.1} parent=5 // pred_region
      %s742 = ssub.s32 %s15, 2
      // Predicated region
      $region73: #{tpu_custom_call.1} parent=71 // pred_check
        %p743 = pneg %p265
      $region74: #{tpu_custom_call.1} parent=71 // pred_check_branch
        %745 = sbr.rel (%p743) target = $region76
      $region75: #{tpu_custom_call.1} parent=71 // pred_region
        %p746 = scmp.lt.s32.totalorder %s28, 1
        %s747 = scalar_select %p746, %s28, 1
        %p748 = scmp.lt.s32.totalorder %s29, 1
        %s749 = scalar_select %p748, %s29, 1
        %s750 = smul.addr %s749, 4
        %s751 = smul.addr %s747, 8
        %s752 = sadd.s32 %s750, %s751
        %s753 = smul.addr %s752, 8
        %s754 = scalar_lea.vmem %s9, %s753
      $region76: #{tpu_custom_call.1} parent=71 // pred_fallthru
        _
    $region72: #{tpu_custom_call.1} parent=5 // pred_fallthru
      _
  $region6: #{tpu_custom_call.1} parent=0 // loop_footer
    %s19 = sadd.s32 1, %s15
  $region7: #{tpu_custom_call.1} parent=0 // loop_footer_branch
    %14 = sbr.rel target = $region3
  $region8: #{tpu_custom_call.1} parent=0 // loop_exit
    _

</llo_original>
